<compile_context>
chip_gen: v7x
topology: tpu7x:2x2x1
jax: 0.10.0
libtpu: 0.0.40
codegen_flags: <defaults>
</compile_context>

<pallas_src>
import jax
import jax.numpy as jnp
from jax.experimental import pallas as pl
from jax.experimental.pallas import tpu as pltpu


def actor_kernel(x_ref, w1_ref, b1_ref, w2_ref, b2_ref,
                 w3_ref, b3_ref, w4_ref, b4_ref, out_ref):
    mm = w1_ref.dtype                     # matmul operand dtype (bf16 or f32)

    # conv1 (k=3, p=1) as dense banded matmul: (TB, Cin*L) @ (Cin*L, C*L)
    y = jnp.dot(x_ref[...], w1_ref[...], preferred_element_type=jnp.float32)
    y = jnp.maximum(y + b1_ref[...], 0.0)                      # (TB, C*L) f32

    # conv2 (k=3, p=1) as dense banded matmul: (TB, C*L) @ (C*L, C*L)
    y = jnp.dot(y.astype(mm), w2_ref[...], preferred_element_type=jnp.float32)
    y = jnp.maximum(y + b2_ref[...], 0.0)                      # (TB, C*L) f32

    # fc1: activation index c*L + l already equals torch's flatten order
    h = jnp.dot(y.astype(mm), w3_ref[...], preferred_element_type=jnp.float32)
    h = jnp.maximum(h + b3_ref[...], 0.0)                      # (TB, H) f32

    # fc2 (action dim padded to a full 128-lane register) + exact softmax
    logits = jnp.dot(h.astype(mm), w4_ref[...],
                     preferred_element_type=jnp.float32) + b4_ref[...]
    m = jnp.max(logits, axis=-1, keepdims=True)
    e = jnp.exp(logits - m)                                    # padded lanes -> 0
    out_ref[...] = (e / jnp.sum(e, axis=-1, keepdims=True)).astype(out_ref.dtype)


def prepare_params(params, compute_dtype=jnp.bfloat16):
    """One-time weight re-layout (hoisted out of the per-call hot path)."""
    w1, b1, w2, b2, fc1w, fc1b, fc2w, fc2b = params
    C, Cin, _K = w1.shape                 # (32, Cin, 3)
    H, CL = fc1w.shape                    # (64, 32*L)
    L = CL // C
    A = fc2w.shape[0]
    A_pad = pl.cdiv(A, 128) * 128         # lane-dense logits / output

    def band(w, Lin):
        # w: (O, Cw, 3) torch Conv1d weight (stride=1, padding=1).
        # Returns W_big with W_big[cw*Lin + l, o*Lin + lp] = w[o, cw, k]
        # where l == lp + k - 1 (zero rows implement the zero padding).
        O, Cw, Kk = w.shape
        l = jnp.arange(Lin)
        big = jnp.zeros((Cw, Lin, O, Lin), jnp.float32)
        for k in range(Kk):
            mask = (l[:, None] == (l[None, :] + k - 1)).astype(jnp.float32)
            big = big + w[:, :, k].T[:, None, :, None] * mask[None, :, None, :]
        return big.reshape(Cw * Lin, O * Lin)

    w1_big = band(w1, L).astype(compute_dtype)                        # (Cin*L, C*L)
    b1_big = jnp.repeat(b1, L).reshape(1, C * L).astype(jnp.float32)  # idx o*L+l
    w2_big = band(w2, L).astype(compute_dtype)                        # (C*L, C*L)
    b2_big = jnp.repeat(b2, L).reshape(1, C * L).astype(jnp.float32)

    # fc1: torch flat index is c*L + l == our activation index; plain transpose.
    w3 = fc1w.T.astype(compute_dtype)                                 # (C*L, H)
    b3 = fc1b.reshape(1, H).astype(jnp.float32)

    # fc2 padded to A_pad lanes; padded logits get a finite -1e30 bias so the
    # max-subtract stays NaN-free and exp() of padded lanes is exactly 0.
    w4 = jnp.zeros((H, A_pad), jnp.float32).at[:, :A].set(fc2w.T).astype(compute_dtype)
    b4 = jnp.full((1, A_pad), -1e30, jnp.float32).at[0, :A].set(fc2b)

    return (w1_big, b1_big, w2_big, b2_big, w3, b3, w4, b4, A)


def _pick_tb(B, block_b):
    """Batch tile: multiple of 8, >=2 grid steps when B is large enough."""
    if block_b is not None:
        tb = min(block_b, B)
        return tb if tb == B else max(8, (tb // 8) * 8)
    if B <= 8:
        return B                          # tiny batch: single full-B block
    # split the batch roughly in half (both v7x TensorCores get work), cap 1024
    return min(1024, pl.cdiv(pl.cdiv(B, 2), 8) * 8)


def actor_forward(x, prepped, *, block_b=None):
    """x: (B, C_in, L) NCL like the PyTorch module. Returns (B, A) f32 probs."""
    w1_big, b1_big, w2_big, b2_big, w3, b3, w4, b4, A = prepped
    B, Cin, L = x.shape
    A_pad = w4.shape[1]
    cdt = w1_big.dtype                    # MXU operand dtype

    # Only per-call plumbing: torch-order flatten (index c*L + l), no transpose/pad.
    x_flat = x.reshape(B, Cin * L).astype(cdt)

    TB = _pick_tb(B, block_b)
    grid = (pl.cdiv(B, TB),)

    weights = (w1_big, b1_big, w2_big, b2_big, w3, b3, w4, b4)
    in_specs = [pl.BlockSpec((TB, Cin * L), lambda i: (i, 0))] + \
               [pl.BlockSpec(w.shape, lambda i: (0, 0)) for w in weights]

    out = pl.pallas_call(
        actor_kernel,
        out_shape=jax.ShapeDtypeStruct((B, A_pad), jnp.float32),
        grid=grid,
        in_specs=in_specs,
        out_specs=pl.BlockSpec((TB, A_pad), lambda i: (i, 0)),
        compiler_params=pltpu.CompilerParams(
            dimension_semantics=("parallel",)),
    )(x_flat, *weights)
    return out[:, :A]


def actor_ref(x, params):
    """Pure-JAX reference matching PyTorch semantics exactly (f32)."""
    w1, b1, w2, b2, fc1w, fc1b, fc2w, fc2b = params
    L = x.shape[2]

    def conv1d(h, w, b):                                 # h: (B, C, L), w: (O, C, 3)
        hp = jnp.pad(h, ((0, 0), (0, 0), (1, 1)))
        out = b[None, :, None]
        for k in range(3):
            out = out + jnp.einsum('bcl,oc->bol', hp[:, :, k:k + L], w[:, :, k])
        return out

    h = jax.nn.relu(conv1d(x, w1, b1))
    h = jax.nn.relu(conv1d(h, w2, b2))
    h = h.reshape(x.shape[0], -1)                        # channel-major flatten
    h = jax.nn.relu(h @ fc1w.T + fc1b)
    return jax.nn.softmax(h @ fc2w.T + fc2b, axis=-1)


def init_params(key, input_dim, action_dim):
    Cin, L = input_dim
    keys = jax.random.split(key, 8)
    w1 = 0.10 * jax.random.normal(keys[0], (32, Cin, 3), jnp.float32)
    b1 = 0.05 * jax.random.normal(keys[1], (32,), jnp.float32)
    w2 = 0.10 * jax.random.normal(keys[2], (32, 32, 3), jnp.float32)
    b2 = 0.05 * jax.random.normal(keys[3], (32,), jnp.float32)
    fc1w = 0.05 * jax.random.normal(keys[4], (64, 32 * L), jnp.float32)
    fc1b = 0.05 * jax.random.normal(keys[5], (64,), jnp.float32)
    fc2w = 0.10 * jax.random.normal(keys[6], (action_dim, 64), jnp.float32)
    fc2b = 0.05 * jax.random.normal(keys[7], (action_dim,), jnp.float32)
    return (w1, b1, w2, b2, fc1w, fc1b, fc2w, fc2b)


if __name__ == "__main__":
    input_dim = (4, 16)      # (channels, length) like the PyTorch module
    action_dim = 6
    batch = 2

    root = jax.random.PRNGKey(0)
    kx, kp, kx2 = jax.random.split(root, 3)
    x = jax.random.normal(kx, (batch, *input_dim), jnp.float32)   # (B, C_in, L)
    params = init_params(kp, input_dim, action_dim)
    ref = jax.block_until_ready(actor_ref(x, params))

    # f32 MXU-operand path: exact banded-conv matmuls + exact softmax divide
    prepped_f32 = prepare_params(params, jnp.float32)
    out_f32 = jax.block_until_ready(actor_forward(x, prepped_f32))
    assert out_f32.shape == (batch, action_dim), out_f32.shape
    assert jnp.allclose(jnp.sum(out_f32, axis=-1), 1.0, atol=1e-5)
    assert jnp.allclose(out_f32, ref, atol=1e-4, rtol=1e-4), (out_f32, ref)

    # bf16 MXU-operand default path (f32 accumulation + f32 epilogue)
    prepped_bf16 = prepare_params(params)                # bf16 by default
    out_bf16 = jax.block_until_ready(actor_forward(x, prepped_bf16))
    assert out_bf16.shape == (batch, action_dim), out_bf16.shape
    assert jnp.allclose(out_bf16, ref, atol=3e-2, rtol=3e-2), (out_bf16, ref)

    # larger batch: exercises a multi-step ("parallel") grid and a partial block
    B2 = 20
    x2 = jax.random.normal(kx2, (B2, *input_dim), jnp.float32)
    ref2 = jax.block_until_ready(actor_ref(x2, params))
    out2 = jax.block_until_ready(actor_forward(x2, prepped_f32))
    assert out2.shape == (B2, action_dim), out2.shape
    assert jnp.allclose(out2, ref2, atol=1e-4, rtol=1e-4), (out2, ref2)

    print("KERNEL_OK")
</pallas_src>

<mosaic_0001>
module attributes {stable_mosaic.version = 11 : i64} {
  func.func @actor_kernel(%arg0: i32, %arg1: memref<2x64xf32, #tpu.memory_space<vmem>>, %arg2: memref<64x512xf32, #tpu.memory_space<vmem>>, %arg3: memref<1x512xf32, #tpu.memory_space<vmem>>, %arg4: memref<512x512xf32, #tpu.memory_space<vmem>>, %arg5: memref<1x512xf32, #tpu.memory_space<vmem>>, %arg6: memref<512x64xf32, #tpu.memory_space<vmem>>, %arg7: memref<1x64xf32, #tpu.memory_space<vmem>>, %arg8: memref<64x128xf32, #tpu.memory_space<vmem>>, %arg9: memref<1x128xf32, #tpu.memory_space<vmem>>, %arg10: memref<2x128xf32, #tpu.memory_space<vmem>>) attributes {dimension_semantics = [#tpu.dimension_semantics<parallel>], iteration_bounds = array<i64: 1>, scalar_prefetch = 0 : i64, scratch_operands = 0 : i64, tpu.core_type = #tpu.core_type<tc>, window_params = [{transform_indices = @transform_0, window_bounds = array<i64: 2, 64>}, {pipeline_mode = #tpu.pipeline_mode<synchronous>, transform_indices = @transform_1, window_bounds = array<i64: 64, 512>}, {pipeline_mode = #tpu.pipeline_mode<synchronous>, transform_indices = @transform_2, window_bounds = array<i64: 1, 512>}, {pipeline_mode = #tpu.pipeline_mode<synchronous>, transform_indices = @transform_3, window_bounds = array<i64: 512, 512>}, {pipeline_mode = #tpu.pipeline_mode<synchronous>, transform_indices = @transform_4, window_bounds = array<i64: 1, 512>}, {pipeline_mode = #tpu.pipeline_mode<synchronous>, transform_indices = @transform_5, window_bounds = array<i64: 512, 64>}, {pipeline_mode = #tpu.pipeline_mode<synchronous>, transform_indices = @transform_6, window_bounds = array<i64: 1, 64>}, {pipeline_mode = #tpu.pipeline_mode<synchronous>, transform_indices = @transform_7, window_bounds = array<i64: 64, 128>}, {pipeline_mode = #tpu.pipeline_mode<synchronous>, transform_indices = @transform_8, window_bounds = array<i64: 1, 128>}, {transform_indices = @transform_9, window_bounds = array<i64: 2, 128>}]} {
    %c0 = arith.constant 0 : index
    %c0_0 = arith.constant 0 : index
    %0 = vector.load %arg1[%c0, %c0_0] : memref<2x64xf32, #tpu.memory_space<vmem>>, vector<2x64xf32>
    %c0_1 = arith.constant 0 : index
    %c0_2 = arith.constant 0 : index
    %1 = vector.load %arg2[%c0_1, %c0_2] : memref<64x512xf32, #tpu.memory_space<vmem>>, vector<64x512xf32>
    %cst = arith.constant dense<0.000000e+00> : vector<2x512xf32>
    %2 = tpu.matmul %0, %1, %cst {dimension_numbers = #tpu.dot_dimension_numbers<[1], [0], [0], [1], [0, 0, 1, 1], [], []>} : vector<2x64xf32>, vector<64x512xf32>, vector<2x512xf32> -> vector<2x512xf32>
    %c0_3 = arith.constant 0 : index
    %c0_4 = arith.constant 0 : index
    %3 = vector.load %arg3[%c0_3, %c0_4] : memref<1x512xf32, #tpu.memory_space<vmem>>, vector<1x512xf32>
    %4 = vector.broadcast %3 : vector<1x512xf32> to vector<2x512xf32>
    %5 = arith.addf %2, %4 : vector<2x512xf32>
    %cst_5 = arith.constant 0.000000e+00 : f32
    %6 = vector.broadcast %cst_5 : f32 to vector<2x512xf32>
    %7 = arith.maximumf %5, %6 : vector<2x512xf32>
    %c0_6 = arith.constant 0 : index
    %c0_7 = arith.constant 0 : index
    %8 = vector.load %arg4[%c0_6, %c0_7] : memref<512x512xf32, #tpu.memory_space<vmem>>, vector<512x512xf32>
    %cst_8 = arith.constant dense<0.000000e+00> : vector<2x512xf32>
    %9 = tpu.matmul %7, %8, %cst_8 {dimension_numbers = #tpu.dot_dimension_numbers<[1], [0], [0], [1], [0, 0, 1, 1], [], []>} : vector<2x512xf32>, vector<512x512xf32>, vector<2x512xf32> -> vector<2x512xf32>
    %c0_9 = arith.constant 0 : index
    %c0_10 = arith.constant 0 : index
    %10 = vector.load %arg5[%c0_9, %c0_10] : memref<1x512xf32, #tpu.memory_space<vmem>>, vector<1x512xf32>
    %11 = vector.broadcast %10 : vector<1x512xf32> to vector<2x512xf32>
    %12 = arith.addf %9, %11 : vector<2x512xf32>
    %cst_11 = arith.constant 0.000000e+00 : f32
    %13 = vector.broadcast %cst_11 : f32 to vector<2x512xf32>
    %14 = arith.maximumf %12, %13 : vector<2x512xf32>
    %c0_12 = arith.constant 0 : index
    %c0_13 = arith.constant 0 : index
    %15 = vector.load %arg6[%c0_12, %c0_13] : memref<512x64xf32, #tpu.memory_space<vmem>>, vector<512x64xf32>
    %cst_14 = arith.constant dense<0.000000e+00> : vector<2x64xf32>
    %16 = tpu.matmul %14, %15, %cst_14 {dimension_numbers = #tpu.dot_dimension_numbers<[1], [0], [0], [1], [0, 0, 1, 1], [], []>} : vector<2x512xf32>, vector<512x64xf32>, vector<2x64xf32> -> vector<2x64xf32>
    %c0_15 = arith.constant 0 : index
    %c0_16 = arith.constant 0 : index
    %17 = vector.load %arg7[%c0_15, %c0_16] : memref<1x64xf32, #tpu.memory_space<vmem>>, vector<1x64xf32>
    %18 = vector.broadcast %17 : vector<1x64xf32> to vector<2x64xf32>
    %19 = arith.addf %16, %18 : vector<2x64xf32>
    %cst_17 = arith.constant 0.000000e+00 : f32
    %20 = vector.broadcast %cst_17 : f32 to vector<2x64xf32>
    %21 = arith.maximumf %19, %20 : vector<2x64xf32>
    %c0_18 = arith.constant 0 : index
    %c0_19 = arith.constant 0 : index
    %22 = vector.load %arg8[%c0_18, %c0_19] : memref<64x128xf32, #tpu.memory_space<vmem>>, vector<64x128xf32>
    %cst_20 = arith.constant dense<0.000000e+00> : vector<2x128xf32>
    %23 = tpu.matmul %21, %22, %cst_20 {dimension_numbers = #tpu.dot_dimension_numbers<[1], [0], [0], [1], [0, 0, 1, 1], [], []>} : vector<2x64xf32>, vector<64x128xf32>, vector<2x128xf32> -> vector<2x128xf32>
    %c0_21 = arith.constant 0 : index
    %c0_22 = arith.constant 0 : index
    %24 = vector.load %arg9[%c0_21, %c0_22] : memref<1x128xf32, #tpu.memory_space<vmem>>, vector<1x128xf32>
    %25 = vector.broadcast %24 : vector<1x128xf32> to vector<2x128xf32>
    %26 = arith.addf %23, %25 : vector<2x128xf32>
    %cst_23 = arith.constant dense<0xFF800000> : vector<2xf32>
    %27 = vector.multi_reduction <maximumf>, %26, %cst_23 [1] : vector<2x128xf32> to vector<2xf32>
    %28 = vector.shape_cast %27 : vector<2xf32> to vector<2x1xf32>
    %29 = vector.broadcast %28 : vector<2x1xf32> to vector<2x128xf32>
    %30 = arith.subf %26, %29 : vector<2x128xf32>
    %31 = math.exp %30 : vector<2x128xf32>
    %cst_24 = arith.constant dense<0.000000e+00> : vector<2xf32>
    %32 = vector.multi_reduction <add>, %31, %cst_24 [1] : vector<2x128xf32> to vector<2xf32>
    %33 = vector.shape_cast %32 : vector<2xf32> to vector<2x1xf32>
    %34 = vector.broadcast %33 : vector<2x1xf32> to vector<2x128xf32>
    %35 = arith.divf %31, %34 : vector<2x128xf32>
    %c0_25 = arith.constant 0 : index
    %c0_26 = arith.constant 0 : index
    %36 = vector.load %arg10[%c0_25, %c0_26] : memref<2x128xf32, #tpu.memory_space<vmem>>, vector<2x128xf32>
    tpu.vector_store %arg10[%c0_25, %c0_26], %35 {strides = array<i32>} : memref<2x128xf32, #tpu.memory_space<vmem>>, vector<2x128xf32>,
    return
  }
  func.func @transform_0(%arg0: i32) -> (i32, i32) {
    %c0_i32 = arith.constant 0 : i32
    %c0_i32_0 = arith.constant 0 : i32
    return %arg0, %c0_i32 : i32, i32
  }
  func.func @transform_1(%arg0: i32) -> (i32, i32) {
    %c0_i32 = arith.constant 0 : i32
    %c0_i32_0 = arith.constant 0 : i32
    %c0_i32_1 = arith.constant 0 : i32
    return %c0_i32, %c0_i32_0 : i32, i32
  }
  func.func @transform_2(%arg0: i32) -> (i32, i32) {
    %c0_i32 = arith.constant 0 : i32
    %c0_i32_0 = arith.constant 0 : i32
    %c0_i32_1 = arith.constant 0 : i32
    return %c0_i32, %c0_i32_0 : i32, i32
  }
  func.func @transform_3(%arg0: i32) -> (i32, i32) {
    %c0_i32 = arith.constant 0 : i32
    %c0_i32_0 = arith.constant 0 : i32
    %c0_i32_1 = arith.constant 0 : i32
    return %c0_i32, %c0_i32_0 : i32, i32
  }
  func.func @transform_4(%arg0: i32) -> (i32, i32) {
    %c0_i32 = arith.constant 0 : i32
    %c0_i32_0 = arith.constant 0 : i32
    %c0_i32_1 = arith.constant 0 : i32
    return %c0_i32, %c0_i32_0 : i32, i32
  }
  func.func @transform_5(%arg0: i32) -> (i32, i32) {
    %c0_i32 = arith.constant 0 : i32
    %c0_i32_0 = arith.constant 0 : i32
    %c0_i32_1 = arith.constant 0 : i32
    return %c0_i32, %c0_i32_0 : i32, i32
  }
  func.func @transform_6(%arg0: i32) -> (i32, i32) {
    %c0_i32 = arith.constant 0 : i32
    %c0_i32_0 = arith.constant 0 : i32
    %c0_i32_1 = arith.constant 0 : i32
    return %c0_i32, %c0_i32_0 : i32, i32
  }
  func.func @transform_7(%arg0: i32) -> (i32, i32) {
    %c0_i32 = arith.constant 0 : i32
    %c0_i32_0 = arith.constant 0 : i32
    %c0_i32_1 = arith.constant 0 : i32
    return %c0_i32, %c0_i32_0 : i32, i32
  }
  func.func @transform_8(%arg0: i32) -> (i32, i32) {
    %c0_i32 = arith.constant 0 : i32
    %c0_i32_0 = arith.constant 0 : i32
    %c0_i32_1 = arith.constant 0 : i32
    return %c0_i32, %c0_i32_0 : i32, i32
  }
  func.func @transform_9(%arg0: i32) -> (i32, i32) {
    %c0_i32 = arith.constant 0 : i32
    %c0_i32_0 = arith.constant 0 : i32
    return %arg0, %c0_i32 : i32, i32
  }
}

</mosaic_0001>

<llo_original>
// kernel: tpu_custom_call.1
$region0: #{tpu_custom_call.1}
  #allocation0 [shape = 'u32[]', space=smem, size = 0x4, offset = 0x4, fixed_abs, tag = 'smem constant byte address 0x4 - core index']
  #allocation1 [shape = 'u32[144,128]{1,0:T(1,128)}', space=vmem, size = 0x12000, scoped, tag = 'internal scratch']
  %s0 = inlined_call_operand.vmem [shape: f32[2,64], index: 0, kind: input, shape index: {}]
  %s1 = inlined_call_operand.vmem [shape: f32[64,512], index: 1, kind: input, shape index: {}]
  %s2 = inlined_call_operand.vmem [shape: f32[1,512], index: 2, kind: input, shape index: {}]
  %s3 = inlined_call_operand.hbm [shape: f32[512,512], index: 3, kind: input, shape index: {}]
  %s4 = inlined_call_operand.vmem [shape: f32[1,512], index: 4, kind: input, shape index: {}]
  %s5 = inlined_call_operand.vmem [shape: f32[512,64], index: 5, kind: input, shape index: {}]
  %s6 = inlined_call_operand.vmem [shape: f32[1,64], index: 6, kind: input, shape index: {}]
  %s7 = inlined_call_operand.vmem [shape: f32[64,128], index: 7, kind: input, shape index: {}]
  %s8 = inlined_call_operand.vmem [shape: f32[1,128], index: 8, kind: input, shape index: {}]
  %s9 = inlined_call_operand.hbm [shape: f32[2,128], index: 9, kind: output, shape index: {}]
  %s10 = sld [smem:[#allocation0]]
  $region50: #{tpu_custom_call.1} parent=0
    _
  %s12 = ssub.s32 1, %s10
  %s13 = scalar_select 0, %s12, %s10
  $region1: #{tpu_custom_call.1} parent=0
    #allocation2 [shape = 'u8[1048576]{0}', space=vmem, size = 0x100000, scoped, tag = 'input window, operand 3, single buffered']
    #allocation3 [shape = 's32[1]{0}', space=sflag, size = 0x4, scoped, tag = 'scoped memory for tpu_custom_call.1']
    #allocation4 [shape = 's32[1]{0}', space=sflag, size = 0x4, scoped, tag = 'scoped memory for tpu_custom_call.1']
    #allocation5 [shape = 'u8[1024]{0}', space=vmem, size = 0x400, scoped, tag = 'output window, operand 0, single buffered']
    %14 = vsyncpa [#allocation3], 0
    %15 = vsyncpa [#allocation4], 0
    // Predicated region
    $region2: #{tpu_custom_call.1} parent=1 // pred_check
      _
    $region3: #{tpu_custom_call.1} parent=1 // pred_check_branch
      %17 = sbr.rel (0) target = $region5
    $region4: #{tpu_custom_call.1} parent=1 // pred_region
      _
    $region5: #{tpu_custom_call.1} parent=1 // pred_fallthru
      _
    // Predicated region
    $region6: #{tpu_custom_call.1} parent=1 // pred_check
      _
    $region7: #{tpu_custom_call.1} parent=1 // pred_check_branch
      %19 = sbr.rel (0) target = $region9
    $region8: #{tpu_custom_call.1} parent=1 // pred_region
      _
    $region9: #{tpu_custom_call.1} parent=1 // pred_fallthru
      _
    // Predicated region
    $region10: #{tpu_custom_call.1} parent=1 // pred_check
      _
    $region11: #{tpu_custom_call.1} parent=1 // pred_check_branch
      %21 = sbr.rel (0) target = $region13
    $region12: #{tpu_custom_call.1} parent=1 // pred_region
      _
    $region13: #{tpu_custom_call.1} parent=1 // pred_fallthru
      _
    // Predicated region
    $region14: #{tpu_custom_call.1} parent=1 // pred_check
      _
    $region15: #{tpu_custom_call.1} parent=1 // pred_check_branch
      %23 = sbr.rel (0) target = $region17
    $region16: #{tpu_custom_call.1} parent=1 // pred_region
      %s25 = ssub.s32 32768, 32768
      %26 = vsyncadd [#allocation3], %s25
      %s27 = sshll.u32 [#allocation2], 4
      %s28 = int_to_ptr.vmem [resolvable:$true] %s27
      %33 = dma.hbm_to_vmem [thread:$0]  %s3, 32768, %s28, [#allocation3], 512, 512, 32
    $region17: #{tpu_custom_call.1} parent=1 // pred_fallthru
      _
    // Predicated region
    $region18: #{tpu_custom_call.1} parent=1 // pred_check
      _
    $region19: #{tpu_custom_call.1} parent=1 // pred_check_branch
      %35 = sbr.rel (0) target = $region21
    $region20: #{tpu_custom_call.1} parent=1 // pred_region
      _
    $region21: #{tpu_custom_call.1} parent=1 // pred_fallthru
      _
    // Predicated region
    $region22: #{tpu_custom_call.1} parent=1 // pred_check
      _
    $region23: #{tpu_custom_call.1} parent=1 // pred_check_branch
      %37 = sbr.rel (0) target = $region25
    $region24: #{tpu_custom_call.1} parent=1 // pred_region
      _
    $region25: #{tpu_custom_call.1} parent=1 // pred_fallthru
      _
    // Predicated region
    $region26: #{tpu_custom_call.1} parent=1 // pred_check
      _
    $region27: #{tpu_custom_call.1} parent=1 // pred_check_branch
      %39 = sbr.rel (0) target = $region29
    $region28: #{tpu_custom_call.1} parent=1 // pred_region
      _
    $region29: #{tpu_custom_call.1} parent=1 // pred_fallthru
      _
    // Predicated region
    $region30: #{tpu_custom_call.1} parent=1 // pred_check
      _
    $region31: #{tpu_custom_call.1} parent=1 // pred_check_branch
      %41 = sbr.rel (0) target = $region33
    $region32: #{tpu_custom_call.1} parent=1 // pred_region
      _
    $region33: #{tpu_custom_call.1} parent=1 // pred_fallthru
      _
    // Predicated region
    $region34: #{tpu_custom_call.1} parent=1 // pred_check
      _
    $region35: #{tpu_custom_call.1} parent=1 // pred_check_branch
      %43 = sbr.rel (0) target = $region37
    $region36: #{tpu_custom_call.1} parent=1 // pred_region
      _
    $region37: #{tpu_custom_call.1} parent=1 // pred_fallthru
      _
    // Predicated region
    $region38: #{tpu_custom_call.1} parent=1 // pred_check
      _
    $region39: #{tpu_custom_call.1} parent=1 // pred_check_branch
      %45 = sbr.rel (0) target = $region41
    $region40: #{tpu_custom_call.1} parent=1 // pred_region
      %46 = dma.done [#allocation3], 32768
    $region41: #{tpu_custom_call.1} parent=1 // pred_fallthru
      _
    %v47 = vld [vmem:[%s0] sm:$0x3]
    %v48 = vld [vmem:[%s1] sm:$0xff]
    %v49 = vld [vmem:[%s1 + $0x8] sm:$0xff]
    %v50 = vld [vmem:[%s1 + $0x10] sm:$0xff]
    %v51 = vld [vmem:[%s1 + $0x18] sm:$0xff]
    %v52 = vld [vmem:[%s1 + $0x20] sm:$0xff]
    %v53 = vld [vmem:[%s1 + $0x28] sm:$0xff]
    %v54 = vld [vmem:[%s1 + $0x30] sm:$0xff]
    %v55 = vld [vmem:[%s1 + $0x38] sm:$0xff]
    %v56 = vld [vmem:[%s1 + $0x40] sm:$0xff]
    %v57 = vld [vmem:[%s1 + $0x48] sm:$0xff]
    %v58 = vld [vmem:[%s1 + $0x50] sm:$0xff]
    %v59 = vld [vmem:[%s1 + $0x58] sm:$0xff]
    %v60 = vld [vmem:[%s1 + $0x60] sm:$0xff]
    %v61 = vld [vmem:[%s1 + $0x68] sm:$0xff]
    %v62 = vld [vmem:[%s1 + $0x70] sm:$0xff]
    %v63 = vld [vmem:[%s1 + $0x78] sm:$0xff]
    %v64 = vld [vmem:[%s1 + $0x80] sm:$0xff]
    %v65 = vld [vmem:[%s1 + $0x88] sm:$0xff]
    %v66 = vld [vmem:[%s1 + $0x90] sm:$0xff]
    %v67 = vld [vmem:[%s1 + $0x98] sm:$0xff]
    %v68 = vld [vmem:[%s1 + $0xa0] sm:$0xff]
    %v69 = vld [vmem:[%s1 + $0xa8] sm:$0xff]
    %v70 = vld [vmem:[%s1 + $0xb0] sm:$0xff]
    %v71 = vld [vmem:[%s1 + $0xb8] sm:$0xff]
    %v72 = vld [vmem:[%s1 + $0xc0] sm:$0xff]
    %v73 = vld [vmem:[%s1 + $0xc8] sm:$0xff]
    %v74 = vld [vmem:[%s1 + $0xd0] sm:$0xff]
    %v75 = vld [vmem:[%s1 + $0xd8] sm:$0xff]
    %v76 = vld [vmem:[%s1 + $0xe0] sm:$0xff]
    %v77 = vld [vmem:[%s1 + $0xe8] sm:$0xff]
    %v78 = vld [vmem:[%s1 + $0xf0] sm:$0xff]
    %v79 = vld [vmem:[%s1 + $0xf8] sm:$0xff]
    %v80 = vld [vmem:[%s2] sm:$0xf]
    %v82 = vlaneseq
    %v83 = vshrl.u32 %v82, 7
    %v84 = vsub.s32 0, %v83
    %v85 = vrot.slane %v80, %v84
    %v86 = vlaneseq
    %v87 = vshrl.u32 %v86, 7
    %v88 = vsub.s32 1, %v87
    %v89 = vrot.slane %v80, %v88
    %v90 = vlaneseq
    %v91 = vshrl.u32 %v90, 7
    %v92 = vsub.s32 2, %v91
    %v93 = vrot.slane %v80, %v92
    %v94 = vlaneseq
    %v95 = vshrl.u32 %v94, 7
    %v96 = vsub.s32 3, %v95
    %v97 = vrot.slane %v80, %v96
    %vm102 = vcmask 523264
    %v104 = vsel %vm102, %v47, 0
    %106 = vmatprep.subr.mxu0 %v49
    %107 = vmatpush1.msra.mxu0 %v48
    %108 = vmatprep.subr.mxu0 %v53
    %109 = vmatpush1.msra.mxu0 %v52
    %110 = vmatprep.subr.mxu0 %v57
    %111 = vmatpush1.msra.mxu0 %v56
    %112 = vmatprep.subr.mxu0 %v61
    %113 = vmatpush1.msra.mxu0 %v60
    %114 = vmatprep.subr.mxu0 %v65
    %115 = vmatpush1.msra.mxu0 %v64
    %116 = vmatprep.subr.mxu0 %v69
    %117 = vmatpush1.msra.mxu0 %v68
    %118 = vmatprep.subr.mxu0 %v73
    %119 = vmatpush1.msra.mxu0 %v72
    %120 = vmatprep.subr.mxu0 %v77
    %121 = vmatpush1.msra.mxu0 %v76
    %122 = vmatprep.subr.mxu0 0.0
    %123 = vmatpush1.msra.mxu0 0.0
    %124 = vmatprep.subr.mxu0 0.0
    %125 = vmatpush1.msra.mxu0 0.0
    %126 = vmatprep.subr.mxu0 0.0
    %127 = vmatpush1.msra.mxu0 0.0
    %128 = vmatprep.subr.mxu0 0.0
    %129 = vmatpush1.msra.mxu0 0.0
    %130 = vmatprep.subr.mxu0 0.0
    %131 = vmatpush1.msra.mxu0 0.0
    %132 = vmatprep.subr.mxu0 0.0
    %133 = vmatpush1.msra.mxu0 0.0
    %134 = vmatprep.subr.mxu0 0.0
    %135 = vmatpush1.msra.mxu0 0.0
    %136 = vmatprep.subr.mxu0 0.0
    %137 = vmatpush1.msra.mxu0 0.0
    %138 = vmatprep.subr.mxu0 0.0
    %139 = vmatpush1.msra.mxu0 0.0
    %140 = vmatprep.subr.mxu0 0.0
    %141 = vmatpush1.msra.mxu0 0.0
    %142 = vmatprep.subr.mxu0 0.0
    %143 = vmatpush1.msra.mxu0 0.0
    %144 = vmatprep.subr.mxu0 0.0
    %145 = vmatpush1.msra.mxu0 0.0
    %146 = vmatprep.subr.mxu0 0.0
    %147 = vmatpush1.msra.mxu0 0.0
    %148 = vmatprep.subr.mxu0 0.0
    %149 = vmatpush1.msra.mxu0 0.0
    %150 = vmatprep.subr.mxu0 0.0
    %151 = vmatpush1.msra.mxu0 0.0
    %152 = vmatprep.subr.mxu0 0.0
    %153 = vmatpush1.msra.mxu0 0.0
    %154 = vmatprep.subr.mxu0 0.0
    %155 = vmatpush1.msra.mxu0 0.0
    %156 = vmatprep.subr.mxu0 0.0
    %157 = vmatpush1.msra.mxu0 0.0
    %158 = vmatprep.subr.mxu0 0.0
    %159 = vmatpush1.msra.mxu0 0.0
    %160 = vmatprep.subr.mxu0 0.0
    %161 = vmatpush1.msra.mxu0 0.0
    %162 = vmatprep.subr.mxu0 0.0
    %163 = vmatpush1.msra.mxu0 0.0
    %164 = vmatprep.subr.mxu0 0.0
    %165 = vmatpush1.msra.mxu0 0.0
    %166 = vmatprep.subr.mxu0 0.0
    %167 = vmatpush1.msra.mxu0 0.0
    %168 = vmatprep.subr.mxu0 0.0
    %169 = vmatpush1.msra.mxu0 0.0
    %170 = vmatprep.mubr.f32.mxu0 0.0
    %171 = vmatmul.mubr.f32.gmra.mrb[0].mxu0 %v104
    %v172 = vpop.f32.mrb[0].mxu0
    %v173 = vadd.f32 %v85, %v172
    %v174 = vpop.f32.mrb[0].mxu0
    %v175 = vadd.f32 %v89, %v174
    %176 = vdwg.mxu0
    %177 = vmatprep.subr.mxu0 %v51
    %178 = vmatpush1.msra.mxu0 %v50
    %179 = vmatprep.subr.mxu0 %v55
    %180 = vmatpush1.msra.mxu0 %v54
    %181 = vmatprep.subr.mxu0 %v59
    %182 = vmatpush1.msra.mxu0 %v58
    %183 = vmatprep.subr.mxu0 %v63
    %184 = vmatpush1.msra.mxu0 %v62
    %185 = vmatprep.subr.mxu0 %v67
    %186 = vmatpush1.msra.mxu0 %v66
    %187 = vmatprep.subr.mxu0 %v71
    %188 = vmatpush1.msra.mxu0 %v70
    %189 = vmatprep.subr.mxu0 %v75
    %190 = vmatpush1.msra.mxu0 %v74
    %191 = vmatprep.subr.mxu0 %v79
    %192 = vmatpush1.msra.mxu0 %v78
    %193 = vmatprep.subr.mxu0 0.0
    %194 = vmatpush1.msra.mxu0 0.0
    %195 = vmatprep.subr.mxu0 0.0
    %196 = vmatpush1.msra.mxu0 0.0
    %197 = vmatprep.subr.mxu0 0.0
    %198 = vmatpush1.msra.mxu0 0.0
    %199 = vmatprep.subr.mxu0 0.0
    %200 = vmatpush1.msra.mxu0 0.0
    %201 = vmatprep.subr.mxu0 0.0
    %202 = vmatpush1.msra.mxu0 0.0
    %203 = vmatprep.subr.mxu0 0.0
    %204 = vmatpush1.msra.mxu0 0.0
    %205 = vmatprep.subr.mxu0 0.0
    %206 = vmatpush1.msra.mxu0 0.0
    %207 = vmatprep.subr.mxu0 0.0
    %208 = vmatpush1.msra.mxu0 0.0
    %209 = vmatprep.subr.mxu0 0.0
    %210 = vmatpush1.msra.mxu0 0.0
    %211 = vmatprep.subr.mxu0 0.0
    %212 = vmatpush1.msra.mxu0 0.0
    %213 = vmatprep.subr.mxu0 0.0
    %214 = vmatpush1.msra.mxu0 0.0
    %215 = vmatprep.subr.mxu0 0.0
    %216 = vmatpush1.msra.mxu0 0.0
    %217 = vmatprep.subr.mxu0 0.0
    %218 = vmatpush1.msra.mxu0 0.0
    %219 = vmatprep.subr.mxu0 0.0
    %220 = vmatpush1.msra.mxu0 0.0
    %221 = vmatprep.subr.mxu0 0.0
    %222 = vmatpush1.msra.mxu0 0.0
    %223 = vmatprep.subr.mxu0 0.0
    %224 = vmatpush1.msra.mxu0 0.0
    %225 = vmatprep.subr.mxu0 0.0
    %226 = vmatpush1.msra.mxu0 0.0
    %227 = vmatprep.subr.mxu0 0.0
    %228 = vmatpush1.msra.mxu0 0.0
    %229 = vmatprep.subr.mxu0 0.0
    %230 = vmatpush1.msra.mxu0 0.0
    %231 = vmatprep.subr.mxu0 0.0
    %232 = vmatpush1.msra.mxu0 0.0
    %233 = vmatprep.subr.mxu0 0.0
    %234 = vmatpush1.msra.mxu0 0.0
    %235 = vmatprep.subr.mxu0 0.0
    %236 = vmatpush1.msra.mxu0 0.0
    %237 = vmatprep.subr.mxu0 0.0
    %238 = vmatpush1.msra.mxu0 0.0
    %239 = vmatprep.subr.mxu0 0.0
    %240 = vmatpush1.msra.mxu0 0.0
    %241 = vmatprep.mubr.f32.mxu0 0.0
    %242 = vmatmul.mubr.f32.gmra.mrb[0].mxu0 %v104
    %v243 = vpop.f32.mrb[0].mxu0
    %v244 = vadd.f32 %v93, %v243
    %v245 = vpop.f32.mrb[0].mxu0
    %v246 = vadd.f32 %v97, %v245
    %247 = vdwg.mxu0
    %v248 = vmax.f32 %v173, 0.0
    %v249 = vmax.f32 %v175, 0.0
    %v250 = vmax.f32 %v244, 0.0
    %v251 = vmax.f32 %v246, 0.0
    %v252 = vld [vmem:[#allocation2] sm:$0xff]
    %v253 = vld [vmem:[#allocation2 + $0x8] sm:$0xff]
    %v254 = vld [vmem:[#allocation2 + $0x10] sm:$0xff]
    %v255 = vld [vmem:[#allocation2 + $0x18] sm:$0xff]
    %v256 = vld [vmem:[#allocation2 + $0x20] sm:$0xff]
    %v257 = vld [vmem:[#allocation2 + $0x28] sm:$0xff]
    %v258 = vld [vmem:[#allocation2 + $0x30] sm:$0xff]
    %v259 = vld [vmem:[#allocation2 + $0x38] sm:$0xff]
    %v260 = vld [vmem:[#allocation2 + $0x40] sm:$0xff]
    %v261 = vld [vmem:[#allocation2 + $0x48] sm:$0xff]
    %v262 = vld [vmem:[#allocation2 + $0x50] sm:$0xff]
    %v263 = vld [vmem:[#allocation2 + $0x58] sm:$0xff]
    %v264 = vld [vmem:[#allocation2 + $0x60] sm:$0xff]
    %v265 = vld [vmem:[#allocation2 + $0x68] sm:$0xff]
    %v266 = vld [vmem:[#allocation2 + $0x70] sm:$0xff]
    %v267 = vld [vmem:[#allocation2 + $0x78] sm:$0xff]
    %v268 = vld [vmem:[#allocation2 + $0x80] sm:$0xff]
    %v269 = vld [vmem:[#allocation2 + $0x88] sm:$0xff]
    %v270 = vld [vmem:[#allocation2 + $0x90] sm:$0xff]
    %v271 = vld [vmem:[#allocation2 + $0x98] sm:$0xff]
    %v272 = vld [vmem:[#allocation2 + $0xa0] sm:$0xff]
    %v273 = vld [vmem:[#allocation2 + $0xa8] sm:$0xff]
    %v274 = vld [vmem:[#allocation2 + $0xb0] sm:$0xff]
    %v275 = vld [vmem:[#allocation2 + $0xb8] sm:$0xff]
    %v276 = vld [vmem:[#allocation2 + $0xc0] sm:$0xff]
    %v277 = vld [vmem:[#allocation2 + $0xc8] sm:$0xff]
    %v278 = vld [vmem:[#allocation2 + $0xd0] sm:$0xff]
    %v279 = vld [vmem:[#allocation2 + $0xd8] sm:$0xff]
    %v280 = vld [vmem:[#allocation2 + $0xe0] sm:$0xff]
    %v281 = vld [vmem:[#allocation2 + $0xe8] sm:$0xff]
    %v282 = vld [vmem:[#allocation2 + $0xf0] sm:$0xff]
    %v283 = vld [vmem:[#allocation2 + $0xf8] sm:$0xff]
    %v284 = vld [vmem:[#allocation2 + $0x100] sm:$0xff]
    %v285 = vld [vmem:[#allocation2 + $0x108] sm:$0xff]
    %v286 = vld [vmem:[#allocation2 + $0x110] sm:$0xff]
    %v287 = vld [vmem:[#allocation2 + $0x118] sm:$0xff]
    %v288 = vld [vmem:[#allocation2 + $0x120] sm:$0xff]
    %v289 = vld [vmem:[#allocation2 + $0x128] sm:$0xff]
    %v290 = vld [vmem:[#allocation2 + $0x130] sm:$0xff]
    %v291 = vld [vmem:[#allocation2 + $0x138] sm:$0xff]
    %v292 = vld [vmem:[#allocation2 + $0x140] sm:$0xff]
    %v293 = vld [vmem:[#allocation2 + $0x148] sm:$0xff]
    %v294 = vld [vmem:[#allocation2 + $0x150] sm:$0xff]
    %v295 = vld [vmem:[#allocation2 + $0x158] sm:$0xff]
    %v296 = vld [vmem:[#allocation2 + $0x160] sm:$0xff]
    %v297 = vld [vmem:[#allocation2 + $0x168] sm:$0xff]
    %v298 = vld [vmem:[#allocation2 + $0x170] sm:$0xff]
    %v299 = vld [vmem:[#allocation2 + $0x178] sm:$0xff]
    %v300 = vld [vmem:[#allocation2 + $0x180] sm:$0xff]
    %v301 = vld [vmem:[#allocation2 + $0x188] sm:$0xff]
    %v302 = vld [vmem:[#allocation2 + $0x190] sm:$0xff]
    %v303 = vld [vmem:[#allocation2 + $0x198] sm:$0xff]
    %v304 = vld [vmem:[#allocation2 + $0x1a0] sm:$0xff]
    %v305 = vld [vmem:[#allocation2 + $0x1a8] sm:$0xff]
    %v306 = vld [vmem:[#allocation2 + $0x1b0] sm:$0xff]
    %v307 = vld [vmem:[#allocation2 + $0x1b8] sm:$0xff]
    %v308 = vld [vmem:[#allocation2 + $0x1c0] sm:$0xff]
    %v309 = vld [vmem:[#allocation2 + $0x1c8] sm:$0xff]
    %v310 = vld [vmem:[#allocation2 + $0x1d0] sm:$0xff]
    %v311 = vld [vmem:[#allocation2 + $0x1d8] sm:$0xff]
    %v312 = vld [vmem:[#allocation2 + $0x1e0] sm:$0xff]
    %v313 = vld [vmem:[#allocation2 + $0x1e8] sm:$0xff]
    %v314 = vld [vmem:[#allocation2 + $0x1f0] sm:$0xff]
    %v315 = vld [vmem:[#allocation2 + $0x1f8] sm:$0xff]
    %v316 = vld [vmem:[#allocation2 + $0x200] sm:$0xff]
    %v317 = vld [vmem:[#allocation2 + $0x208] sm:$0xff]
    %v318 = vld [vmem:[#allocation2 + $0x210] sm:$0xff]
    %v319 = vld [vmem:[#allocation2 + $0x218] sm:$0xff]
    %v320 = vld [vmem:[#allocation2 + $0x220] sm:$0xff]
    %v321 = vld [vmem:[#allocation2 + $0x228] sm:$0xff]
    %v322 = vld [vmem:[#allocation2 + $0x230] sm:$0xff]
    %v323 = vld [vmem:[#allocation2 + $0x238] sm:$0xff]
    %v324 = vld [vmem:[#allocation2 + $0x240] sm:$0xff]
    %v325 = vld [vmem:[#allocation2 + $0x248] sm:$0xff]
    %v326 = vld [vmem:[#allocation2 + $0x250] sm:$0xff]
    %v327 = vld [vmem:[#allocation2 + $0x258] sm:$0xff]
    %v328 = vld [vmem:[#allocation2 + $0x260] sm:$0xff]
    %v329 = vld [vmem:[#allocation2 + $0x268] sm:$0xff]
    %v330 = vld [vmem:[#allocation2 + $0x270] sm:$0xff]
    %v331 = vld [vmem:[#allocation2 + $0x278] sm:$0xff]
    %v332 = vld [vmem:[#allocation2 + $0x280] sm:$0xff]
    %v333 = vld [vmem:[#allocation2 + $0x288] sm:$0xff]
    %v334 = vld [vmem:[#allocation2 + $0x290] sm:$0xff]
    %v335 = vld [vmem:[#allocation2 + $0x298] sm:$0xff]
    %v336 = vld [vmem:[#allocation2 + $0x2a0] sm:$0xff]
    %v337 = vld [vmem:[#allocation2 + $0x2a8] sm:$0xff]
    %v338 = vld [vmem:[#allocation2 + $0x2b0] sm:$0xff]
    %v339 = vld [vmem:[#allocation2 + $0x2b8] sm:$0xff]
    %v340 = vld [vmem:[#allocation2 + $0x2c0] sm:$0xff]
    %v341 = vld [vmem:[#allocation2 + $0x2c8] sm:$0xff]
    %v342 = vld [vmem:[#allocation2 + $0x2d0] sm:$0xff]
    %v343 = vld [vmem:[#allocation2 + $0x2d8] sm:$0xff]
    %v344 = vld [vmem:[#allocation2 + $0x2e0] sm:$0xff]
    %v345 = vld [vmem:[#allocation2 + $0x2e8] sm:$0xff]
    %v346 = vld [vmem:[#allocation2 + $0x2f0] sm:$0xff]
    %v347 = vld [vmem:[#allocation2 + $0x2f8] sm:$0xff]
    %v348 = vld [vmem:[#allocation2 + $0x300] sm:$0xff]
    %v349 = vld [vmem:[#allocation2 + $0x308] sm:$0xff]
    %v350 = vld [vmem:[#allocation2 + $0x310] sm:$0xff]
    %v351 = vld [vmem:[#allocation2 + $0x318] sm:$0xff]
    %v352 = vld [vmem:[#allocation2 + $0x320] sm:$0xff]
    %v353 = vld [vmem:[#allocation2 + $0x328] sm:$0xff]
    %v354 = vld [vmem:[#allocation2 + $0x330] sm:$0xff]
    %v355 = vld [vmem:[#allocation2 + $0x338] sm:$0xff]
    %v356 = vld [vmem:[#allocation2 + $0x340] sm:$0xff]
    %v357 = vld [vmem:[#allocation2 + $0x348] sm:$0xff]
    %v358 = vld [vmem:[#allocation2 + $0x350] sm:$0xff]
    %v359 = vld [vmem:[#allocation2 + $0x358] sm:$0xff]
    %v360 = vld [vmem:[#allocation2 + $0x360] sm:$0xff]
    %v361 = vld [vmem:[#allocation2 + $0x368] sm:$0xff]
    %v362 = vld [vmem:[#allocation2 + $0x370] sm:$0xff]
    %v363 = vld [vmem:[#allocation2 + $0x378] sm:$0xff]
    %v364 = vld [vmem:[#allocation2 + $0x380] sm:$0xff]
    %v365 = vld [vmem:[#allocation2 + $0x388] sm:$0xff]
    %v366 = vld [vmem:[#allocation2 + $0x390] sm:$0xff]
    %v367 = vld [vmem:[#allocation2 + $0x398] sm:$0xff]
    %v368 = vld [vmem:[#allocation2 + $0x3a0] sm:$0xff]
    %v369 = vld [vmem:[#allocation2 + $0x3a8] sm:$0xff]
    %v370 = vld [vmem:[#allocation2 + $0x3b0] sm:$0xff]
    %v371 = vld [vmem:[#allocation2 + $0x3b8] sm:$0xff]
    %v372 = vld [vmem:[#allocation2 + $0x3c0] sm:$0xff]
    %v373 = vld [vmem:[#allocation2 + $0x3c8] sm:$0xff]
    %v374 = vld [vmem:[#allocation2 + $0x3d0] sm:$0xff]
    %v375 = vld [vmem:[#allocation2 + $0x3d8] sm:$0xff]
    %v376 = vld [vmem:[#allocation2 + $0x3e0] sm:$0xff]
    %v377 = vld [vmem:[#allocation2 + $0x3e8] sm:$0xff]
    %v378 = vld [vmem:[#allocation2 + $0x3f0] sm:$0xff]
    %v379 = vld [vmem:[#allocation2 + $0x3f8] sm:$0xff]
    %v380 = vld [vmem:[#allocation2 + $0x400] sm:$0xff]
    %v381 = vld [vmem:[#allocation2 + $0x408] sm:$0xff]
    %v382 = vld [vmem:[#allocation2 + $0x410] sm:$0xff]
    %v383 = vld [vmem:[#allocation2 + $0x418] sm:$0xff]
    %v384 = vld [vmem:[#allocation2 + $0x420] sm:$0xff]
    %v385 = vld [vmem:[#allocation2 + $0x428] sm:$0xff]
    %v386 = vld [vmem:[#allocation2 + $0x430] sm:$0xff]
    %v387 = vld [vmem:[#allocation2 + $0x438] sm:$0xff]
    %v388 = vld [vmem:[#allocation2 + $0x440] sm:$0xff]
    %v389 = vld [vmem:[#allocation2 + $0x448] sm:$0xff]
    %v390 = vld [vmem:[#allocation2 + $0x450] sm:$0xff]
    %v391 = vld [vmem:[#allocation2 + $0x458] sm:$0xff]
    %v392 = vld [vmem:[#allocation2 + $0x460] sm:$0xff]
    %v393 = vld [vmem:[#allocation2 + $0x468] sm:$0xff]
    %v394 = vld [vmem:[#allocation2 + $0x470] sm:$0xff]
    %v395 = vld [vmem:[#allocation2 + $0x478] sm:$0xff]
    %v396 = vld [vmem:[#allocation2 + $0x480] sm:$0xff]
    %v397 = vld [vmem:[#allocation2 + $0x488] sm:$0xff]
    %v398 = vld [vmem:[#allocation2 + $0x490] sm:$0xff]
    %v399 = vld [vmem:[#allocation2 + $0x498] sm:$0xff]
    %v400 = vld [vmem:[#allocation2 + $0x4a0] sm:$0xff]
    %v401 = vld [vmem:[#allocation2 + $0x4a8] sm:$0xff]
    %v402 = vld [vmem:[#allocation2 + $0x4b0] sm:$0xff]
    %v403 = vld [vmem:[#allocation2 + $0x4b8] sm:$0xff]
    %v404 = vld [vmem:[#allocation2 + $0x4c0] sm:$0xff]
    %v405 = vld [vmem:[#allocation2 + $0x4c8] sm:$0xff]
    %v406 = vld [vmem:[#allocation2 + $0x4d0] sm:$0xff]
    %v407 = vld [vmem:[#allocation2 + $0x4d8] sm:$0xff]
    %v408 = vld [vmem:[#allocation2 + $0x4e0] sm:$0xff]
    %v409 = vld [vmem:[#allocation2 + $0x4e8] sm:$0xff]
    %v410 = vld [vmem:[#allocation2 + $0x4f0] sm:$0xff]
    %v411 = vld [vmem:[#allocation2 + $0x4f8] sm:$0xff]
    %v412 = vld [vmem:[#allocation2 + $0x500] sm:$0xff]
    %v413 = vld [vmem:[#allocation2 + $0x508] sm:$0xff]
    %v414 = vld [vmem:[#allocation2 + $0x510] sm:$0xff]
    %v415 = vld [vmem:[#allocation2 + $0x518] sm:$0xff]
    %v416 = vld [vmem:[#allocation2 + $0x520] sm:$0xff]
    %v417 = vld [vmem:[#allocation2 + $0x528] sm:$0xff]
    %v418 = vld [vmem:[#allocation2 + $0x530] sm:$0xff]
    %v419 = vld [vmem:[#allocation2 + $0x538] sm:$0xff]
    %v420 = vld [vmem:[#allocation2 + $0x540] sm:$0xff]
    %v421 = vld [vmem:[#allocation2 + $0x548] sm:$0xff]
    %v422 = vld [vmem:[#allocation2 + $0x550] sm:$0xff]
    %v423 = vld [vmem:[#allocation2 + $0x558] sm:$0xff]
    %v424 = vld [vmem:[#allocation2 + $0x560] sm:$0xff]
    %v425 = vld [vmem:[#allocation2 + $0x568] sm:$0xff]
    %v426 = vld [vmem:[#allocation2 + $0x570] sm:$0xff]
    %v427 = vld [vmem:[#allocation2 + $0x578] sm:$0xff]
    %v428 = vld [vmem:[#allocation2 + $0x580] sm:$0xff]
    %v429 = vld [vmem:[#allocation2 + $0x588] sm:$0xff]
    %v430 = vld [vmem:[#allocation2 + $0x590] sm:$0xff]
    %v431 = vld [vmem:[#allocation2 + $0x598] sm:$0xff]
    %v432 = vld [vmem:[#allocation2 + $0x5a0] sm:$0xff]
    %v433 = vld [vmem:[#allocation2 + $0x5a8] sm:$0xff]
    %v434 = vld [vmem:[#allocation2 + $0x5b0] sm:$0xff]
    %v435 = vld [vmem:[#allocation2 + $0x5b8] sm:$0xff]
    %v436 = vld [vmem:[#allocation2 + $0x5c0] sm:$0xff]
    %v437 = vld [vmem:[#allocation2 + $0x5c8] sm:$0xff]
    %v438 = vld [vmem:[#allocation2 + $0x5d0] sm:$0xff]
    %v439 = vld [vmem:[#allocation2 + $0x5d8] sm:$0xff]
    %v440 = vld [vmem:[#allocation2 + $0x5e0] sm:$0xff]
    %v441 = vld [vmem:[#allocation2 + $0x5e8] sm:$0xff]
    %v442 = vld [vmem:[#allocation2 + $0x5f0] sm:$0xff]
    %v443 = vld [vmem:[#allocation2 + $0x5f8] sm:$0xff]
    %v444 = vld [vmem:[#allocation2 + $0x600] sm:$0xff]
    %v445 = vld [vmem:[#allocation2 + $0x608] sm:$0xff]
    %v446 = vld [vmem:[#allocation2 + $0x610] sm:$0xff]
    %v447 = vld [vmem:[#allocation2 + $0x618] sm:$0xff]
    %v448 = vld [vmem:[#allocation2 + $0x620] sm:$0xff]
    %v449 = vld [vmem:[#allocation2 + $0x628] sm:$0xff]
    %v450 = vld [vmem:[#allocation2 + $0x630] sm:$0xff]
    %v451 = vld [vmem:[#allocation2 + $0x638] sm:$0xff]
    %v452 = vld [vmem:[#allocation2 + $0x640] sm:$0xff]
    %v453 = vld [vmem:[#allocation2 + $0x648] sm:$0xff]
    %v454 = vld [vmem:[#allocation2 + $0x650] sm:$0xff]
    %v455 = vld [vmem:[#allocation2 + $0x658] sm:$0xff]
    %v456 = vld [vmem:[#allocation2 + $0x660] sm:$0xff]
    %v457 = vld [vmem:[#allocation2 + $0x668] sm:$0xff]
    %v458 = vld [vmem:[#allocation2 + $0x670] sm:$0xff]
    %v459 = vld [vmem:[#allocation2 + $0x678] sm:$0xff]
    %v460 = vld [vmem:[#allocation2 + $0x680] sm:$0xff]
    %v461 = vld [vmem:[#allocation2 + $0x688] sm:$0xff]
    %v462 = vld [vmem:[#allocation2 + $0x690] sm:$0xff]
    %v463 = vld [vmem:[#allocation2 + $0x698] sm:$0xff]
    %v464 = vld [vmem:[#allocation2 + $0x6a0] sm:$0xff]
    %v465 = vld [vmem:[#allocation2 + $0x6a8] sm:$0xff]
    %v466 = vld [vmem:[#allocation2 + $0x6b0] sm:$0xff]
    %v467 = vld [vmem:[#allocation2 + $0x6b8] sm:$0xff]
    %v468 = vld [vmem:[#allocation2 + $0x6c0] sm:$0xff]
    %v469 = vld [vmem:[#allocation2 + $0x6c8] sm:$0xff]
    %v470 = vld [vmem:[#allocation2 + $0x6d0] sm:$0xff]
    %v471 = vld [vmem:[#allocation2 + $0x6d8] sm:$0xff]
    %v472 = vld [vmem:[#allocation2 + $0x6e0] sm:$0xff]
    %v473 = vld [vmem:[#allocation2 + $0x6e8] sm:$0xff]
    %v474 = vld [vmem:[#allocation2 + $0x6f0] sm:$0xff]
    %v475 = vld [vmem:[#allocation2 + $0x6f8] sm:$0xff]
    %v476 = vld [vmem:[#allocation2 + $0x700] sm:$0xff]
    %v477 = vld [vmem:[#allocation2 + $0x708] sm:$0xff]
    %v478 = vld [vmem:[#allocation2 + $0x710] sm:$0xff]
    %v479 = vld [vmem:[#allocation2 + $0x718] sm:$0xff]
    %v480 = vld [vmem:[#allocation2 + $0x720] sm:$0xff]
    %v481 = vld [vmem:[#allocation2 + $0x728] sm:$0xff]
    %v482 = vld [vmem:[#allocation2 + $0x730] sm:$0xff]
    %v483 = vld [vmem:[#allocation2 + $0x738] sm:$0xff]
    %v484 = vld [vmem:[#allocation2 + $0x740] sm:$0xff]
    %v485 = vld [vmem:[#allocation2 + $0x748] sm:$0xff]
    %v486 = vld [vmem:[#allocation2 + $0x750] sm:$0xff]
    %v487 = vld [vmem:[#allocation2 + $0x758] sm:$0xff]
    %v488 = vld [vmem:[#allocation2 + $0x760] sm:$0xff]
    %v489 = vld [vmem:[#allocation2 + $0x768] sm:$0xff]
    %v490 = vld [vmem:[#allocation2 + $0x770] sm:$0xff]
    %v491 = vld [vmem:[#allocation2 + $0x778] sm:$0xff]
    %v492 = vld [vmem:[#allocation2 + $0x780] sm:$0xff]
    %v493 = vld [vmem:[#allocation2 + $0x788] sm:$0xff]
    %v494 = vld [vmem:[#allocation2 + $0x790] sm:$0xff]
    %v495 = vld [vmem:[#allocation2 + $0x798] sm:$0xff]
    %v496 = vld [vmem:[#allocation2 + $0x7a0] sm:$0xff]
    %v497 = vld [vmem:[#allocation2 + $0x7a8] sm:$0xff]
    %v498 = vld [vmem:[#allocation2 + $0x7b0] sm:$0xff]
    %v499 = vld [vmem:[#allocation2 + $0x7b8] sm:$0xff]
    %v500 = vld [vmem:[#allocation2 + $0x7c0] sm:$0xff]
    %v501 = vld [vmem:[#allocation2 + $0x7c8] sm:$0xff]
    %v502 = vld [vmem:[#allocation2 + $0x7d0] sm:$0xff]
    %v503 = vld [vmem:[#allocation2 + $0x7d8] sm:$0xff]
    %v504 = vld [vmem:[#allocation2 + $0x7e0] sm:$0xff]
    %v505 = vld [vmem:[#allocation2 + $0x7e8] sm:$0xff]
    %v506 = vld [vmem:[#allocation2 + $0x7f0] sm:$0xff]
    %v507 = vld [vmem:[#allocation2 + $0x7f8] sm:$0xff]
    %v508 = vld [vmem:[%s4] sm:$0xf]
    %v510 = vlaneseq
    %v511 = vshrl.u32 %v510, 7
    %v512 = vsub.s32 0, %v511
    %v513 = vrot.slane %v508, %v512
    %v514 = vlaneseq
    %v515 = vshrl.u32 %v514, 7
    %v516 = vsub.s32 1, %v515
    %v517 = vrot.slane %v508, %v516
    %v518 = vlaneseq
    %v519 = vshrl.u32 %v518, 7
    %v520 = vsub.s32 2, %v519
    %v521 = vrot.slane %v508, %v520
    %v522 = vlaneseq
    %v523 = vshrl.u32 %v522, 7
    %v524 = vsub.s32 3, %v523
    %v525 = vrot.slane %v508, %v524
    %530 = vmatprep.subr.mxu0 %v253
    %531 = vmatpush1.msra.mxu0 %v252
    %532 = vmatprep.subr.mxu0 %v257
    %533 = vmatpush1.msra.mxu0 %v256
    %534 = vmatprep.subr.mxu0 %v261
    %535 = vmatpush1.msra.mxu0 %v260
    %536 = vmatprep.subr.mxu0 %v265
    %537 = vmatpush1.msra.mxu0 %v264
    %538 = vmatprep.subr.mxu0 %v269
    %539 = vmatpush1.msra.mxu0 %v268
    %540 = vmatprep.subr.mxu0 %v273
    %541 = vmatpush1.msra.mxu0 %v272
    %542 = vmatprep.subr.mxu0 %v277
    %543 = vmatpush1.msra.mxu0 %v276
    %544 = vmatprep.subr.mxu0 %v281
    %545 = vmatpush1.msra.mxu0 %v280
    %546 = vmatprep.subr.mxu0 %v285
    %547 = vmatpush1.msra.mxu0 %v284
    %548 = vmatprep.subr.mxu0 %v289
    %549 = vmatpush1.msra.mxu0 %v288
    %550 = vmatprep.subr.mxu0 %v293
    %551 = vmatpush1.msra.mxu0 %v292
    %552 = vmatprep.subr.mxu0 %v297
    %553 = vmatpush1.msra.mxu0 %v296
    %554 = vmatprep.subr.mxu0 %v301
    %555 = vmatpush1.msra.mxu0 %v300
    %556 = vmatprep.subr.mxu0 %v305
    %557 = vmatpush1.msra.mxu0 %v304
    %558 = vmatprep.subr.mxu0 %v309
    %559 = vmatpush1.msra.mxu0 %v308
    %560 = vmatprep.subr.mxu0 %v313
    %561 = vmatpush1.msra.mxu0 %v312
    %562 = vmatprep.subr.mxu0 %v317
    %563 = vmatpush1.msra.mxu0 %v316
    %564 = vmatprep.subr.mxu0 %v321
    %565 = vmatpush1.msra.mxu0 %v320
    %566 = vmatprep.subr.mxu0 %v325
    %567 = vmatpush1.msra.mxu0 %v324
    %568 = vmatprep.subr.mxu0 %v329
    %569 = vmatpush1.msra.mxu0 %v328
    %570 = vmatprep.subr.mxu0 %v333
    %571 = vmatpush1.msra.mxu0 %v332
    %572 = vmatprep.subr.mxu0 %v337
    %573 = vmatpush1.msra.mxu0 %v336
    %574 = vmatprep.subr.mxu0 %v341
    %575 = vmatpush1.msra.mxu0 %v340
    %576 = vmatprep.subr.mxu0 %v345
    %577 = vmatpush1.msra.mxu0 %v344
    %578 = vmatprep.subr.mxu0 %v349
    %579 = vmatpush1.msra.mxu0 %v348
    %580 = vmatprep.subr.mxu0 %v353
    %581 = vmatpush1.msra.mxu0 %v352
    %582 = vmatprep.subr.mxu0 %v357
    %583 = vmatpush1.msra.mxu0 %v356
    %584 = vmatprep.subr.mxu0 %v361
    %585 = vmatpush1.msra.mxu0 %v360
    %586 = vmatprep.subr.mxu0 %v365
    %587 = vmatpush1.msra.mxu0 %v364
    %588 = vmatprep.subr.mxu0 %v369
    %589 = vmatpush1.msra.mxu0 %v368
    %590 = vmatprep.subr.mxu0 %v373
    %591 = vmatpush1.msra.mxu0 %v372
    %592 = vmatprep.subr.mxu0 %v377
    %593 = vmatpush1.msra.mxu0 %v376
    %594 = vmatprep.mubr.f32.mxu0 %v249
    %595 = vmatmul.mubr.f32.gmra.mrb[0].mxu0 %v248
    %v596 = vpop.f32.mrb[0].mxu0
    %v597 = vadd.f32 %v513, %v596
    %v598 = vpop.f32.mrb[0].mxu0
    %v599 = vadd.f32 %v517, %v598
    %600 = vdwg.mxu0
    %601 = vmatprep.subr.mxu0 %v381
    %602 = vmatpush1.msra.mxu0 %v380
    %603 = vmatprep.subr.mxu0 %v385
    %604 = vmatpush1.msra.mxu0 %v384
    %605 = vmatprep.subr.mxu0 %v389
    %606 = vmatpush1.msra.mxu0 %v388
    %607 = vmatprep.subr.mxu0 %v393
    %608 = vmatpush1.msra.mxu0 %v392
    %609 = vmatprep.subr.mxu0 %v397
    %610 = vmatpush1.msra.mxu0 %v396
    %611 = vmatprep.subr.mxu0 %v401
    %612 = vmatpush1.msra.mxu0 %v400
    %613 = vmatprep.subr.mxu0 %v405
    %614 = vmatpush1.msra.mxu0 %v404
    %615 = vmatprep.subr.mxu0 %v409
    %616 = vmatpush1.msra.mxu0 %v408
    %617 = vmatprep.subr.mxu0 %v413
    %618 = vmatpush1.msra.mxu0 %v412
    %619 = vmatprep.subr.mxu0 %v417
    %620 = vmatpush1.msra.mxu0 %v416
    %621 = vmatprep.subr.mxu0 %v421
    %622 = vmatpush1.msra.mxu0 %v420
    %623 = vmatprep.subr.mxu0 %v425
    %624 = vmatpush1.msra.mxu0 %v424
    %625 = vmatprep.subr.mxu0 %v429
    %626 = vmatpush1.msra.mxu0 %v428
    %627 = vmatprep.subr.mxu0 %v433
    %628 = vmatpush1.msra.mxu0 %v432
    %629 = vmatprep.subr.mxu0 %v437
    %630 = vmatpush1.msra.mxu0 %v436
    %631 = vmatprep.subr.mxu0 %v441
    %632 = vmatpush1.msra.mxu0 %v440
    %633 = vmatprep.subr.mxu0 %v445
    %634 = vmatpush1.msra.mxu0 %v444
    %635 = vmatprep.subr.mxu0 %v449
    %636 = vmatpush1.msra.mxu0 %v448
    %637 = vmatprep.subr.mxu0 %v453
    %638 = vmatpush1.msra.mxu0 %v452
    %639 = vmatprep.subr.mxu0 %v457
    %640 = vmatpush1.msra.mxu0 %v456
    %641 = vmatprep.subr.mxu0 %v461
    %642 = vmatpush1.msra.mxu0 %v460
    %643 = vmatprep.subr.mxu0 %v465
    %644 = vmatpush1.msra.mxu0 %v464
    %645 = vmatprep.subr.mxu0 %v469
    %646 = vmatpush1.msra.mxu0 %v468
    %647 = vmatprep.subr.mxu0 %v473
    %648 = vmatpush1.msra.mxu0 %v472
    %649 = vmatprep.subr.mxu0 %v477
    %650 = vmatpush1.msra.mxu0 %v476
    %651 = vmatprep.subr.mxu0 %v481
    %652 = vmatpush1.msra.mxu0 %v480
    %653 = vmatprep.subr.mxu0 %v485
    %654 = vmatpush1.msra.mxu0 %v484
    %655 = vmatprep.subr.mxu0 %v489
    %656 = vmatpush1.msra.mxu0 %v488
    %657 = vmatprep.subr.mxu0 %v493
    %658 = vmatpush1.msra.mxu0 %v492
    %659 = vmatprep.subr.mxu0 %v497
    %660 = vmatpush1.msra.mxu0 %v496
    %661 = vmatprep.subr.mxu0 %v501
    %662 = vmatpush1.msra.mxu0 %v500
    %663 = vmatprep.subr.mxu0 %v505
    %664 = vmatpush1.msra.mxu0 %v504
    %665 = vmatprep.mubr.f32.mxu0 %v251
    %666 = vmatmul.mubr.f32.gmra.mrb[0].mxu0 %v250
    %v667 = vpop.f32.mrb[0].mxu0
    %v668 = vadd.f32 %v597, %v667
    %v669 = vpop.f32.mrb[0].mxu0
    %v670 = vadd.f32 %v599, %v669
    %671 = vdwg.mxu0
    %672 = vmatprep.subr.mxu0 %v255
    %673 = vmatpush1.msra.mxu0 %v254
    %674 = vmatprep.subr.mxu0 %v259
    %675 = vmatpush1.msra.mxu0 %v258
    %676 = vmatprep.subr.mxu0 %v263
    %677 = vmatpush1.msra.mxu0 %v262
    %678 = vmatprep.subr.mxu0 %v267
    %679 = vmatpush1.msra.mxu0 %v266
    %680 = vmatprep.subr.mxu0 %v271
    %681 = vmatpush1.msra.mxu0 %v270
    %682 = vmatprep.subr.mxu0 %v275
    %683 = vmatpush1.msra.mxu0 %v274
    %684 = vmatprep.subr.mxu0 %v279
    %685 = vmatpush1.msra.mxu0 %v278
    %686 = vmatprep.subr.mxu0 %v283
    %687 = vmatpush1.msra.mxu0 %v282
    %688 = vmatprep.subr.mxu0 %v287
    %689 = vmatpush1.msra.mxu0 %v286
    %690 = vmatprep.subr.mxu0 %v291
    %691 = vmatpush1.msra.mxu0 %v290
    %692 = vmatprep.subr.mxu0 %v295
    %693 = vmatpush1.msra.mxu0 %v294
    %694 = vmatprep.subr.mxu0 %v299
    %695 = vmatpush1.msra.mxu0 %v298
    %696 = vmatprep.subr.mxu0 %v303
    %697 = vmatpush1.msra.mxu0 %v302
    %698 = vmatprep.subr.mxu0 %v307
    %699 = vmatpush1.msra.mxu0 %v306
    %700 = vmatprep.subr.mxu0 %v311
    %701 = vmatpush1.msra.mxu0 %v310
    %702 = vmatprep.subr.mxu0 %v315
    %703 = vmatpush1.msra.mxu0 %v314
    %704 = vmatprep.subr.mxu0 %v319
    %705 = vmatpush1.msra.mxu0 %v318
    %706 = vmatprep.subr.mxu0 %v323
    %707 = vmatpush1.msra.mxu0 %v322
    %708 = vmatprep.subr.mxu0 %v327
    %709 = vmatpush1.msra.mxu0 %v326
    %710 = vmatprep.subr.mxu0 %v331
    %711 = vmatpush1.msra.mxu0 %v330
    %712 = vmatprep.subr.mxu0 %v335
    %713 = vmatpush1.msra.mxu0 %v334
    %714 = vmatprep.subr.mxu0 %v339
    %715 = vmatpush1.msra.mxu0 %v338
    %716 = vmatprep.subr.mxu0 %v343
    %717 = vmatpush1.msra.mxu0 %v342
    %718 = vmatprep.subr.mxu0 %v347
    %719 = vmatpush1.msra.mxu0 %v346
    %720 = vmatprep.subr.mxu0 %v351
    %721 = vmatpush1.msra.mxu0 %v350
    %722 = vmatprep.subr.mxu0 %v355
    %723 = vmatpush1.msra.mxu0 %v354
    %724 = vmatprep.subr.mxu0 %v359
    %725 = vmatpush1.msra.mxu0 %v358
    %726 = vmatprep.subr.mxu0 %v363
    %727 = vmatpush1.msra.mxu0 %v362
    %728 = vmatprep.subr.mxu0 %v367
    %729 = vmatpush1.msra.mxu0 %v366
    %730 = vmatprep.subr.mxu0 %v371
    %731 = vmatpush1.msra.mxu0 %v370
    %732 = vmatprep.subr.mxu0 %v375
    %733 = vmatpush1.msra.mxu0 %v374
    %734 = vmatprep.subr.mxu0 %v379
    %735 = vmatpush1.msra.mxu0 %v378
    %736 = vmatprep.mubr.f32.mxu0 %v249
    %737 = vmatmul.mubr.f32.gmra.mrb[0].mxu0 %v248
    %v738 = vpop.f32.mrb[0].mxu0
    %v739 = vadd.f32 %v521, %v738
    %v740 = vpop.f32.mrb[0].mxu0
    %v741 = vadd.f32 %v525, %v740
    %742 = vdwg.mxu0
    %743 = vmatprep.subr.mxu0 %v383
    %744 = vmatpush1.msra.mxu0 %v382
    %745 = vmatprep.subr.mxu0 %v387
    %746 = vmatpush1.msra.mxu0 %v386
    %747 = vmatprep.subr.mxu0 %v391
    %748 = vmatpush1.msra.mxu0 %v390
    %749 = vmatprep.subr.mxu0 %v395
    %750 = vmatpush1.msra.mxu0 %v394
    %751 = vmatprep.subr.mxu0 %v399
    %752 = vmatpush1.msra.mxu0 %v398
    %753 = vmatprep.subr.mxu0 %v403
    %754 = vmatpush1.msra.mxu0 %v402
    %755 = vmatprep.subr.mxu0 %v407
    %756 = vmatpush1.msra.mxu0 %v406
    %757 = vmatprep.subr.mxu0 %v411
    %758 = vmatpush1.msra.mxu0 %v410
    %759 = vmatprep.subr.mxu0 %v415
    %760 = vmatpush1.msra.mxu0 %v414
    %761 = vmatprep.subr.mxu0 %v419
    %762 = vmatpush1.msra.mxu0 %v418
    %763 = vmatprep.subr.mxu0 %v423
    %764 = vmatpush1.msra.mxu0 %v422
    %765 = vmatprep.subr.mxu0 %v427
    %766 = vmatpush1.msra.mxu0 %v426
    %767 = vmatprep.subr.mxu0 %v431
    %768 = vmatpush1.msra.mxu0 %v430
    %769 = vmatprep.subr.mxu0 %v435
    %770 = vmatpush1.msra.mxu0 %v434
    %771 = vmatprep.subr.mxu0 %v439
    %772 = vmatpush1.msra.mxu0 %v438
    %773 = vmatprep.subr.mxu0 %v443
    %774 = vmatpush1.msra.mxu0 %v442
    %775 = vmatprep.subr.mxu0 %v447
    %776 = vmatpush1.msra.mxu0 %v446
    %777 = vmatprep.subr.mxu0 %v451
    %778 = vmatpush1.msra.mxu0 %v450
    %779 = vmatprep.subr.mxu0 %v455
    %780 = vmatpush1.msra.mxu0 %v454
    %781 = vmatprep.subr.mxu0 %v459
    %782 = vmatpush1.msra.mxu0 %v458
    %783 = vmatprep.subr.mxu0 %v463
    %784 = vmatpush1.msra.mxu0 %v462
    %785 = vmatprep.subr.mxu0 %v467
    %786 = vmatpush1.msra.mxu0 %v466
    %787 = vmatprep.subr.mxu0 %v471
    %788 = vmatpush1.msra.mxu0 %v470
    %789 = vmatprep.subr.mxu0 %v475
    %790 = vmatpush1.msra.mxu0 %v474
    %791 = vmatprep.subr.mxu0 %v479
    %792 = vmatpush1.msra.mxu0 %v478
    %793 = vmatprep.subr.mxu0 %v483
    %794 = vmatpush1.msra.mxu0 %v482
    %795 = vmatprep.subr.mxu0 %v487
    %796 = vmatpush1.msra.mxu0 %v486
    %797 = vmatprep.subr.mxu0 %v491
    %798 = vmatpush1.msra.mxu0 %v490
    %799 = vmatprep.subr.mxu0 %v495
    %800 = vmatpush1.msra.mxu0 %v494
    %801 = vmatprep.subr.mxu0 %v499
    %802 = vmatpush1.msra.mxu0 %v498
    %803 = vmatprep.subr.mxu0 %v503
    %804 = vmatpush1.msra.mxu0 %v502
    %805 = vmatprep.subr.mxu0 %v507
    %806 = vmatpush1.msra.mxu0 %v506
    %807 = vmatprep.mubr.f32.mxu0 %v251
    %808 = vmatmul.mubr.f32.gmra.mrb[0].mxu0 %v250
    %v809 = vpop.f32.mrb[0].mxu0
    %v810 = vadd.f32 %v739, %v809
    %v811 = vpop.f32.mrb[0].mxu0
    %v812 = vadd.f32 %v741, %v811
    %813 = vdwg.mxu0
    %v814 = vmax.f32 %v668, 0.0
    %v815 = vmax.f32 %v670, 0.0
    %v816 = vmax.f32 %v810, 0.0
    %v817 = vmax.f32 %v812, 0.0
    %v818 = vld [vmem:[%s5] sm:$0xff]
    %v819 = vld [vmem:[%s5 + $0x8] sm:$0xff]
    %v820 = vld [vmem:[%s5 + $0x10] sm:$0xff]
    %v821 = vld [vmem:[%s5 + $0x18] sm:$0xff]
    %v822 = vld [vmem:[%s5 + $0x20] sm:$0xff]
    %v823 = vld [vmem:[%s5 + $0x28] sm:$0xff]
    %v824 = vld [vmem:[%s5 + $0x30] sm:$0xff]
    %v825 = vld [vmem:[%s5 + $0x38] sm:$0xff]
    %v826 = vld [vmem:[%s5 + $0x40] sm:$0xff]
    %v827 = vld [vmem:[%s5 + $0x48] sm:$0xff]
    %v828 = vld [vmem:[%s5 + $0x50] sm:$0xff]
    %v829 = vld [vmem:[%s5 + $0x58] sm:$0xff]
    %v830 = vld [vmem:[%s5 + $0x60] sm:$0xff]
    %v831 = vld [vmem:[%s5 + $0x68] sm:$0xff]
    %v832 = vld [vmem:[%s5 + $0x70] sm:$0xff]
    %v833 = vld [vmem:[%s5 + $0x78] sm:$0xff]
    %v834 = vld [vmem:[%s5 + $0x80] sm:$0xff]
    %v835 = vld [vmem:[%s5 + $0x88] sm:$0xff]
    %v836 = vld [vmem:[%s5 + $0x90] sm:$0xff]
    %v837 = vld [vmem:[%s5 + $0x98] sm:$0xff]
    %v838 = vld [vmem:[%s5 + $0xa0] sm:$0xff]
    %v839 = vld [vmem:[%s5 + $0xa8] sm:$0xff]
    %v840 = vld [vmem:[%s5 + $0xb0] sm:$0xff]
    %v841 = vld [vmem:[%s5 + $0xb8] sm:$0xff]
    %v842 = vld [vmem:[%s5 + $0xc0] sm:$0xff]
    %v843 = vld [vmem:[%s5 + $0xc8] sm:$0xff]
    %v844 = vld [vmem:[%s5 + $0xd0] sm:$0xff]
    %v845 = vld [vmem:[%s5 + $0xd8] sm:$0xff]
    %v846 = vld [vmem:[%s5 + $0xe0] sm:$0xff]
    %v847 = vld [vmem:[%s5 + $0xe8] sm:$0xff]
    %v848 = vld [vmem:[%s5 + $0xf0] sm:$0xff]
    %v849 = vld [vmem:[%s5 + $0xf8] sm:$0xff]
    %v850 = vld [vmem:[%s5 + $0x100] sm:$0xff]
    %v851 = vld [vmem:[%s5 + $0x108] sm:$0xff]
    %v852 = vld [vmem:[%s5 + $0x110] sm:$0xff]
    %v853 = vld [vmem:[%s5 + $0x118] sm:$0xff]
    %v854 = vld [vmem:[%s5 + $0x120] sm:$0xff]
    %v855 = vld [vmem:[%s5 + $0x128] sm:$0xff]
    %v856 = vld [vmem:[%s5 + $0x130] sm:$0xff]
    %v857 = vld [vmem:[%s5 + $0x138] sm:$0xff]
    %v858 = vld [vmem:[%s5 + $0x140] sm:$0xff]
    %v859 = vld [vmem:[%s5 + $0x148] sm:$0xff]
    %v860 = vld [vmem:[%s5 + $0x150] sm:$0xff]
    %v861 = vld [vmem:[%s5 + $0x158] sm:$0xff]
    %v862 = vld [vmem:[%s5 + $0x160] sm:$0xff]
    %v863 = vld [vmem:[%s5 + $0x168] sm:$0xff]
    %v864 = vld [vmem:[%s5 + $0x170] sm:$0xff]
    %v865 = vld [vmem:[%s5 + $0x178] sm:$0xff]
    %v866 = vld [vmem:[%s5 + $0x180] sm:$0xff]
    %v867 = vld [vmem:[%s5 + $0x188] sm:$0xff]
    %v868 = vld [vmem:[%s5 + $0x190] sm:$0xff]
    %v869 = vld [vmem:[%s5 + $0x198] sm:$0xff]
    %v870 = vld [vmem:[%s5 + $0x1a0] sm:$0xff]
    %v871 = vld [vmem:[%s5 + $0x1a8] sm:$0xff]
    %v872 = vld [vmem:[%s5 + $0x1b0] sm:$0xff]
    %v873 = vld [vmem:[%s5 + $0x1b8] sm:$0xff]
    %v874 = vld [vmem:[%s5 + $0x1c0] sm:$0xff]
    %v875 = vld [vmem:[%s5 + $0x1c8] sm:$0xff]
    %v876 = vld [vmem:[%s5 + $0x1d0] sm:$0xff]
    %v877 = vld [vmem:[%s5 + $0x1d8] sm:$0xff]
    %v878 = vld [vmem:[%s5 + $0x1e0] sm:$0xff]
    %v879 = vld [vmem:[%s5 + $0x1e8] sm:$0xff]
    %v880 = vld [vmem:[%s5 + $0x1f0] sm:$0xff]
    %v881 = vld [vmem:[%s5 + $0x1f8] sm:$0xff]
    %v882 = vld [vmem:[%s6] sm:$0x1]
    %v884 = vlaneseq
    %v885 = vshrl.u32 %v884, 7
    %v886 = vsub.s32 0, %v885
    %v887 = vrot.slane %v882, %v886
    %889 = vmatprep.subr.mxu0 0.0
    %890 = vmatpush1.msra.mxu0 %v818
    %891 = vmatprep.subr.mxu0 0.0
    %892 = vmatpush1.msra.mxu0 %v819
    %893 = vmatprep.subr.mxu0 0.0
    %894 = vmatpush1.msra.mxu0 %v820
    %895 = vmatprep.subr.mxu0 0.0
    %896 = vmatpush1.msra.mxu0 %v821
    %897 = vmatprep.subr.mxu0 0.0
    %898 = vmatpush1.msra.mxu0 %v822
    %899 = vmatprep.subr.mxu0 0.0
    %900 = vmatpush1.msra.mxu0 %v823
    %901 = vmatprep.subr.mxu0 0.0
    %902 = vmatpush1.msra.mxu0 %v824
    %903 = vmatprep.subr.mxu0 0.0
    %904 = vmatpush1.msra.mxu0 %v825
    %905 = vmatprep.subr.mxu0 0.0
    %906 = vmatpush1.msra.mxu0 %v826
    %907 = vmatprep.subr.mxu0 0.0
    %908 = vmatpush1.msra.mxu0 %v827
    %909 = vmatprep.subr.mxu0 0.0
    %910 = vmatpush1.msra.mxu0 %v828
    %911 = vmatprep.subr.mxu0 0.0
    %912 = vmatpush1.msra.mxu0 %v829
    %913 = vmatprep.subr.mxu0 0.0
    %914 = vmatpush1.msra.mxu0 %v830
    %915 = vmatprep.subr.mxu0 0.0
    %916 = vmatpush1.msra.mxu0 %v831
    %917 = vmatprep.subr.mxu0 0.0
    %918 = vmatpush1.msra.mxu0 %v832
    %919 = vmatprep.subr.mxu0 0.0
    %920 = vmatpush1.msra.mxu0 %v833
    %921 = vmatprep.subr.mxu0 0.0
    %922 = vmatpush1.msra.mxu0 %v834
    %923 = vmatprep.subr.mxu0 0.0
    %924 = vmatpush1.msra.mxu0 %v835
    %925 = vmatprep.subr.mxu0 0.0
    %926 = vmatpush1.msra.mxu0 %v836
    %927 = vmatprep.subr.mxu0 0.0
    %928 = vmatpush1.msra.mxu0 %v837
    %929 = vmatprep.subr.mxu0 0.0
    %930 = vmatpush1.msra.mxu0 %v838
    %931 = vmatprep.subr.mxu0 0.0
    %932 = vmatpush1.msra.mxu0 %v839
    %933 = vmatprep.subr.mxu0 0.0
    %934 = vmatpush1.msra.mxu0 %v840
    %935 = vmatprep.subr.mxu0 0.0
    %936 = vmatpush1.msra.mxu0 %v841
    %937 = vmatprep.subr.mxu0 0.0
    %938 = vmatpush1.msra.mxu0 %v842
    %939 = vmatprep.subr.mxu0 0.0
    %940 = vmatpush1.msra.mxu0 %v843
    %941 = vmatprep.subr.mxu0 0.0
    %942 = vmatpush1.msra.mxu0 %v844
    %943 = vmatprep.subr.mxu0 0.0
    %944 = vmatpush1.msra.mxu0 %v845
    %945 = vmatprep.subr.mxu0 0.0
    %946 = vmatpush1.msra.mxu0 %v846
    %947 = vmatprep.subr.mxu0 0.0
    %948 = vmatpush1.msra.mxu0 %v847
    %949 = vmatprep.subr.mxu0 0.0
    %950 = vmatpush1.msra.mxu0 %v848
    %951 = vmatprep.subr.mxu0 0.0
    %952 = vmatpush1.msra.mxu0 %v849
    %953 = vmatprep.mubr.f32.mxu0 %v815
    %954 = vmatmul.mubr.f32.gmra.mrb[0].mxu0 %v814
    %v955 = vpop.f32.mrb[0].mxu0
    %v956 = vadd.f32 %v887, %v955
    %v957 = vpop.f32.mrb[0].mxu0
    %958 = vdwg.mxu0
    %959 = vmatprep.subr.mxu0 0.0
    %960 = vmatpush1.msra.mxu0 %v850
    %961 = vmatprep.subr.mxu0 0.0
    %962 = vmatpush1.msra.mxu0 %v851
    %963 = vmatprep.subr.mxu0 0.0
    %964 = vmatpush1.msra.mxu0 %v852
    %965 = vmatprep.subr.mxu0 0.0
    %966 = vmatpush1.msra.mxu0 %v853
    %967 = vmatprep.subr.mxu0 0.0
    %968 = vmatpush1.msra.mxu0 %v854
    %969 = vmatprep.subr.mxu0 0.0
    %970 = vmatpush1.msra.mxu0 %v855
    %971 = vmatprep.subr.mxu0 0.0
    %972 = vmatpush1.msra.mxu0 %v856
    %973 = vmatprep.subr.mxu0 0.0
    %974 = vmatpush1.msra.mxu0 %v857
    %975 = vmatprep.subr.mxu0 0.0
    %976 = vmatpush1.msra.mxu0 %v858
    %977 = vmatprep.subr.mxu0 0.0
    %978 = vmatpush1.msra.mxu0 %v859
    %979 = vmatprep.subr.mxu0 0.0
    %980 = vmatpush1.msra.mxu0 %v860
    %981 = vmatprep.subr.mxu0 0.0
    %982 = vmatpush1.msra.mxu0 %v861
    %983 = vmatprep.subr.mxu0 0.0
    %984 = vmatpush1.msra.mxu0 %v862
    %985 = vmatprep.subr.mxu0 0.0
    %986 = vmatpush1.msra.mxu0 %v863
    %987 = vmatprep.subr.mxu0 0.0
    %988 = vmatpush1.msra.mxu0 %v864
    %989 = vmatprep.subr.mxu0 0.0
    %990 = vmatpush1.msra.mxu0 %v865
    %991 = vmatprep.subr.mxu0 0.0
    %992 = vmatpush1.msra.mxu0 %v866
    %993 = vmatprep.subr.mxu0 0.0
    %994 = vmatpush1.msra.mxu0 %v867
    %995 = vmatprep.subr.mxu0 0.0
    %996 = vmatpush1.msra.mxu0 %v868
    %997 = vmatprep.subr.mxu0 0.0
    %998 = vmatpush1.msra.mxu0 %v869
    %999 = vmatprep.subr.mxu0 0.0
    %1000 = vmatpush1.msra.mxu0 %v870
    %1001 = vmatprep.subr.mxu0 0.0
    %1002 = vmatpush1.msra.mxu0 %v871
    %1003 = vmatprep.subr.mxu0 0.0
    %1004 = vmatpush1.msra.mxu0 %v872
    %1005 = vmatprep.subr.mxu0 0.0
    %1006 = vmatpush1.msra.mxu0 %v873
    %1007 = vmatprep.subr.mxu0 0.0
    %1008 = vmatpush1.msra.mxu0 %v874
    %1009 = vmatprep.subr.mxu0 0.0
    %1010 = vmatpush1.msra.mxu0 %v875
    %1011 = vmatprep.subr.mxu0 0.0
    %1012 = vmatpush1.msra.mxu0 %v876
    %1013 = vmatprep.subr.mxu0 0.0
    %1014 = vmatpush1.msra.mxu0 %v877
    %1015 = vmatprep.subr.mxu0 0.0
    %1016 = vmatpush1.msra.mxu0 %v878
    %1017 = vmatprep.subr.mxu0 0.0
    %1018 = vmatpush1.msra.mxu0 %v879
    %1019 = vmatprep.subr.mxu0 0.0
    %1020 = vmatpush1.msra.mxu0 %v880
    %1021 = vmatprep.subr.mxu0 0.0
    %1022 = vmatpush1.msra.mxu0 %v881
    %1023 = vmatprep.mubr.f32.mxu0 %v817
    %1024 = vmatmul.mubr.f32.gmra.mrb[0].mxu0 %v816
    %v1025 = vpop.f32.mrb[0].mxu0
    %v1026 = vadd.f32 %v956, %v1025
    %v1027 = vpop.f32.mrb[0].mxu0
    %1028 = vdwg.mxu0
    %v1029 = vmax.f32 %v1026, 0.0
    %v1030 = vld [vmem:[%s7] sm:$0xff]
    %v1031 = vld [vmem:[%s7 + $0x8] sm:$0xff]
    %v1032 = vld [vmem:[%s7 + $0x10] sm:$0xff]
    %v1033 = vld [vmem:[%s7 + $0x18] sm:$0xff]
    %v1034 = vld [vmem:[%s7 + $0x20] sm:$0xff]
    %v1035 = vld [vmem:[%s7 + $0x28] sm:$0xff]
    %v1036 = vld [vmem:[%s7 + $0x30] sm:$0xff]
    %v1037 = vld [vmem:[%s7 + $0x38] sm:$0xff]
    %v1038 = vld [vmem:[%s8] sm:$0x1]
    %v1040 = vlaneseq
    %v1041 = vshrl.u32 %v1040, 7
    %v1042 = vsub.s32 0, %v1041
    %v1043 = vrot.slane %v1038, %v1042
    %v1046 = vsel %vm102, %v1029, 0
    %1048 = vmatprep.subr.mxu0 0.0
    %1049 = vmatpush1.msra.mxu0 %v1030
    %1050 = vmatprep.subr.mxu0 0.0
    %1051 = vmatpush1.msra.mxu0 %v1031
    %1052 = vmatprep.subr.mxu0 0.0
    %1053 = vmatpush1.msra.mxu0 %v1032
    %1054 = vmatprep.subr.mxu0 0.0
    %1055 = vmatpush1.msra.mxu0 %v1033
    %1056 = vmatprep.subr.mxu0 0.0
    %1057 = vmatpush1.msra.mxu0 %v1034
    %1058 = vmatprep.subr.mxu0 0.0
    %1059 = vmatpush1.msra.mxu0 %v1035
    %1060 = vmatprep.subr.mxu0 0.0
    %1061 = vmatpush1.msra.mxu0 %v1036
    %1062 = vmatprep.subr.mxu0 0.0
    %1063 = vmatpush1.msra.mxu0 %v1037
    %1064 = vmatprep.subr.mxu0 0.0
    %1065 = vmatpush1.msra.mxu0 0.0
    %1066 = vmatprep.subr.mxu0 0.0
    %1067 = vmatpush1.msra.mxu0 0.0
    %1068 = vmatprep.subr.mxu0 0.0
    %1069 = vmatpush1.msra.mxu0 0.0
    %1070 = vmatprep.subr.mxu0 0.0
    %1071 = vmatpush1.msra.mxu0 0.0
    %1072 = vmatprep.subr.mxu0 0.0
    %1073 = vmatpush1.msra.mxu0 0.0
    %1074 = vmatprep.subr.mxu0 0.0
    %1075 = vmatpush1.msra.mxu0 0.0
    %1076 = vmatprep.subr.mxu0 0.0
    %1077 = vmatpush1.msra.mxu0 0.0
    %1078 = vmatprep.subr.mxu0 0.0
    %1079 = vmatpush1.msra.mxu0 0.0
    %1080 = vmatprep.subr.mxu0 0.0
    %1081 = vmatpush1.msra.mxu0 0.0
    %1082 = vmatprep.subr.mxu0 0.0
    %1083 = vmatpush1.msra.mxu0 0.0
    %1084 = vmatprep.subr.mxu0 0.0
    %1085 = vmatpush1.msra.mxu0 0.0
    %1086 = vmatprep.subr.mxu0 0.0
    %1087 = vmatpush1.msra.mxu0 0.0
    %1088 = vmatprep.subr.mxu0 0.0
    %1089 = vmatpush1.msra.mxu0 0.0
    %1090 = vmatprep.subr.mxu0 0.0
    %1091 = vmatpush1.msra.mxu0 0.0
    %1092 = vmatprep.subr.mxu0 0.0
    %1093 = vmatpush1.msra.mxu0 0.0
    %1094 = vmatprep.subr.mxu0 0.0
    %1095 = vmatpush1.msra.mxu0 0.0
    %1096 = vmatprep.subr.mxu0 0.0
    %1097 = vmatpush1.msra.mxu0 0.0
    %1098 = vmatprep.subr.mxu0 0.0
    %1099 = vmatpush1.msra.mxu0 0.0
    %1100 = vmatprep.subr.mxu0 0.0
    %1101 = vmatpush1.msra.mxu0 0.0
    %1102 = vmatprep.subr.mxu0 0.0
    %1103 = vmatpush1.msra.mxu0 0.0
    %1104 = vmatprep.subr.mxu0 0.0
    %1105 = vmatpush1.msra.mxu0 0.0
    %1106 = vmatprep.subr.mxu0 0.0
    %1107 = vmatpush1.msra.mxu0 0.0
    %1108 = vmatprep.subr.mxu0 0.0
    %1109 = vmatpush1.msra.mxu0 0.0
    %1110 = vmatprep.subr.mxu0 0.0
    %1111 = vmatpush1.msra.mxu0 0.0
    %1112 = vmatprep.mubr.f32.mxu0 0.0
    %1113 = vmatmul.mubr.f32.gmra.mrb[0].mxu0 %v1046
    %v1114 = vpop.f32.mrb[0].mxu0
    %v1115 = vadd.f32 %v1043, %v1114
    %v1116 = vpop.f32.mrb[0].mxu0
    %1117 = vdwg.mxu0
    %vm1118 = vcmask 1041408
    %v1119 = vsel %vm1118, %v1115, -inf
    %1120 = vmax.xlane.f32.xlu0 %v1119
    %v1121 = vpop.xlane.xlu0 %1120
    %v1122 = vsub.f32 %v1115, %v1121
    %v1123 = vmul.f32 %v1122, 1.442695
    %v1124 = vpow.pop %v1123
    %v1125 = vsel %vm1118, %v1124, 0.0
    %1126 = vadd.xlane.f32.xlu0 %v1125
    %v1127 = vpop.xlane.xlu0 %1126
    %v1128 = vrcp.pop %v1127
    %v1129 = vmul.f32 %v1124, %v1128
    %1130 = vst [vmem:[#allocation5] sm:$0x3] %v1129
    // Predicated region
    $region42: #{tpu_custom_call.1} parent=1 // pred_check
      _
    $region43: #{tpu_custom_call.1} parent=1 // pred_check_branch
      %1132 = sbr.rel (0) target = $region45
    $region44: #{tpu_custom_call.1} parent=1 // pred_region
      %s1134 = ssub.s32 32, 32
      %1135 = vsyncadd [#allocation4], %s1134
      %s1137 = sshll.u32 [#allocation5], 4
      %s1138 = int_to_ptr.vmem [resolvable:$true] %s1137
      %1140 = dma.vmem_to_hbm [thread:$0]  %s1138, 32, %s9, [#allocation4]
    $region45: #{tpu_custom_call.1} parent=1 // pred_fallthru
      _
    // Predicated region
    $region46: #{tpu_custom_call.1} parent=1 // pred_check
      _
    $region47: #{tpu_custom_call.1} parent=1 // pred_check_branch
      %1142 = sbr.rel (0) target = $region49
    $region48: #{tpu_custom_call.1} parent=1 // pred_region
      %1143 = dma.done [#allocation4], 32
    $region49: #{tpu_custom_call.1} parent=1 // pred_fallthru
      _
    %1144 = vsyncpa [#allocation3], 1
    %1145 = vsyncpa [#allocation4], 1

</llo_original>
